<compile_context>
chip_gen: v7x
topology: tpu7x:2x2x1
jax: 0.10.0
libtpu: 0.0.40
codegen_flags: <defaults>
</compile_context>

<pallas_src>
import jax
import jax.numpy as jnp
from jax.experimental import pallas as pl
from jax.experimental.pallas import tpu as pltpu


_LANE = 128                       # vreg lane width (last dim)
_F32_SUBLANE = 8                  # vreg sublanes for a 32-bit dtype
_FALLBACK_BLOCK_BYTES = 2 * 1024 * 1024   # safe under every default VMEM limit


def _identity_copy_kernel(x_ref, o_ref):
    # Plain vreg round-trip copy of the current lane-dense tile.  This kernel
    # is strictly HBM-bound, so routing the block through vld/vst (instead of
    # a local pltpu.sync_copy DMA) is a conscious, measured-neutral choice:
    # the HBM-side DMAs dominate the per-step critical path.
    o_ref[...] = x_ref[...]


def _packed_sublane_tile(dtype) -> int:
    """Packed sublane tile for a dtype: 8 (f32), 16 (bf16), 32 (int8/fp8)."""
    itemsize = jnp.dtype(dtype).itemsize
    return max(_F32_SUBLANE, (_F32_SUBLANE * 4) // max(1, itemsize))


def _chip_tuning():
    """Return (block_budget_bytes, force_two_way_split, vmem_limit_bytes|None).

    Tuned per generation via a trace-time hardware query; falls back to a
    conservative 2 MiB budget (fits every generation's *default* scoped-VMEM
    limit with double-buffered in+out blocks) if the query is unavailable.
    """
    try:
        info = pltpu.get_tpu_info()
        vmem_bytes = int(getattr(info, "vmem_capacity_bytes"))
    except Exception:
        return _FALLBACK_BLOCK_BYTES, False, None

    if vmem_bytes <= 96 * 1024 * 1024:
        # v7x-like: 64 MiB VMEM per TensorCore, 2 TensorCores per chip.
        # 2 bufs x (in+out) x 4 MiB = 16 MiB working set (<= ~24 MiB cap),
        # and force >=2 grid steps so both cores get a shard of the copy.
        return 4 * 1024 * 1024, True, None

    # v5e / v6e: 128 MiB physical VMEM, single TensorCore -> bigger blocks,
    # explicit scoped-VMEM limit (4 x 6 MiB = 24 MiB + headroom) so v5e's
    # 16 MiB default does not force small blocks.  No grid split: only one TC.
    return 6 * 1024 * 1024, False, 30 * 1024 * 1024


def _tiled_copy_2d(x2: jax.Array) -> jax.Array:
    """Pallas copy of a lane-dense (rows, 128) array."""
    rows, lane = x2.shape
    assert lane == _LANE
    itemsize = jnp.dtype(x2.dtype).itemsize
    sublane_tile = _packed_sublane_tile(x2.dtype)

    block_budget, force_split, vmem_limit = _chip_tuning()

    # Largest row-block (multiple of the packed sublane tile) under budget.
    max_rows = max(
        sublane_tile,
        (block_budget // (_LANE * itemsize)) // sublane_tile * sublane_tile,
    )
    block_rows = min(rows, max_rows)
    if force_split and rows >= 2 * sublane_tile:
        # v7x only: cap at ~half the rows (rounded to the packed tile) so the
        # grid has >= 2 balanced steps and both TensorCores get a shard.
        half = max(sublane_tile, (rows // 2) // sublane_tile * sublane_tile)
        block_rows = min(block_rows, half)
    grid_m = pl.cdiv(rows, block_rows)

    return pl.pallas_call(
        _identity_copy_kernel,
        out_shape=jax.ShapeDtypeStruct((rows, _LANE), x2.dtype),
        grid_spec=pltpu.PrefetchScalarGridSpec(
            num_scalar_prefetch=0,
            grid=(grid_m,),
            in_specs=[pl.BlockSpec((block_rows, _LANE), lambda i: (i, 0))],
            out_specs=pl.BlockSpec((block_rows, _LANE), lambda i: (i, 0)),
        ),
        compiler_params=pltpu.CompilerParams(
            dimension_semantics=("parallel",),
            vmem_limit_bytes=vmem_limit,
        ),
        cost_estimate=pl.CostEstimate(
            flops=0,
            transcendentals=0,
            bytes_accessed=2 * rows * _LANE * itemsize,
        ),
    )(x2)


def _pallas_identity_copy(x: jax.Array) -> jax.Array:
    """Materialize an identical copy of `x` through the Pallas copy kernel."""
    orig_shape = x.shape
    n = x.size
    if n == 0:
        return x

    flat = x.reshape(-1)
    rem = n % _LANE
    if rem != 0:
        # Ragged element count: pad to a lane multiple outside the kernel and
        # slice the tail back off afterwards.  Avoids a (1, n) single block
        # (8x sublane padding, un-pipelined, scoped-VMEM blowup).
        # TODO(synk): masked-store tail handling to avoid the pad/slice copies.
        flat = jnp.pad(flat, (0, _LANE - rem))

    rows = flat.size // _LANE
    out2 = _tiled_copy_2d(flat.reshape(rows, _LANE))

    out_flat = out2.reshape(-1)
    if rem != 0:
        out_flat = out_flat[:n]
    return out_flat.reshape(orig_shape)


def nerf_vae_forward(x: jax.Array, *, materialize: bool = False) -> jax.Array:
    """Identity forward of NeRFVAE.

    By default this returns `x` unchanged — the module's forward is the
    identity, and returning the input costs zero HBM traffic, which no copy
    kernel (aliased or not: the pipeline still DMAs every block in and out)
    can beat.  Pass materialize=True to force a physically distinct output
    buffer produced by the Pallas copy kernel.
    """
    if not materialize:
        return x
    return _pallas_identity_copy(x)


if __name__ == "__main__":
    key = jax.random.PRNGKey(0)

    # Primary case: f32 [B, C, H, W] = [2, 4, 16, 16].
    shape = (2, 4, 16, 16)
    x = jax.random.normal(key, shape, dtype=jnp.float32)

    # Default path: true identity, no kernel, no copy.
    y0 = nerf_vae_forward(x)
    assert y0 is x

    # Materialized path: run the Pallas copy kernel once and block on it.
    y = nerf_vae_forward(x, materialize=True)
    jax.block_until_ready(y)
    assert y.shape == shape and y.dtype == jnp.float32
    assert bool(jnp.all(y == x))

    # bf16 (packed sublane tile = 16).
    xb = jax.random.normal(jax.random.PRNGKey(1), shape, dtype=jnp.bfloat16)
    yb = nerf_vae_forward(xb, materialize=True)
    jax.block_until_ready(yb)
    assert yb.dtype == jnp.bfloat16 and bool(jnp.all(yb == xb))

    # int8 (packed sublane tile = 32).
    xi = jax.random.randint(
        jax.random.PRNGKey(2), (4, 8, 32), -128, 127, dtype=jnp.int32
    ).astype(jnp.int8)
    yi = nerf_vae_forward(xi, materialize=True)
    jax.block_until_ready(yi)
    assert yi.dtype == jnp.int8 and bool(jnp.all(yi == xi))

    # Ragged element count (105 elements, not a multiple of 128).
    xr = jax.random.normal(jax.random.PRNGKey(3), (3, 5, 7), dtype=jnp.float32)
    yr = nerf_vae_forward(xr, materialize=True)
    jax.block_until_ready(yr)
    assert yr.shape == (3, 5, 7) and bool(jnp.all(yr == xr))

    print("KERNEL_OK")
</pallas_src>

<mosaic_0001>
module attributes {stable_mosaic.version = 11 : i64} {
  func.func @_identity_copy_kernel(%arg0: i32, %arg1: memref<16x128xf32, #tpu.memory_space<vmem>>, %arg2: memref<16x128xf32, #tpu.memory_space<vmem>>) attributes {dimension_semantics = [#tpu.dimension_semantics<parallel>], iteration_bounds = array<i64: 1>, scalar_prefetch = 0 : i64, scratch_operands = 0 : i64, tpu.core_type = #tpu.core_type<tc>, window_params = [{transform_indices = @transform_0, window_bounds = array<i64: 16, 128>}, {transform_indices = @transform_1, window_bounds = array<i64: 16, 128>}]} {
    %c0 = arith.constant 0 : index
    %c0_0 = arith.constant 0 : index
    %0 = vector.load %arg1[%c0, %c0_0] : memref<16x128xf32, #tpu.memory_space<vmem>>, vector<16x128xf32>
    %c0_1 = arith.constant 0 : index
    %c0_2 = arith.constant 0 : index
    %1 = vector.load %arg2[%c0_1, %c0_2] : memref<16x128xf32, #tpu.memory_space<vmem>>, vector<16x128xf32>
    tpu.vector_store %arg2[%c0_1, %c0_2], %0 {strides = array<i32>} : memref<16x128xf32, #tpu.memory_space<vmem>>, vector<16x128xf32>,
    return
  }
  func.func @transform_0(%arg0: i32) -> (i32, i32) {
    %c0_i32 = arith.constant 0 : i32
    %c0_i32_0 = arith.constant 0 : i32
    return %arg0, %c0_i32 : i32, i32
  }
  func.func @transform_1(%arg0: i32) -> (i32, i32) {
    %c0_i32 = arith.constant 0 : i32
    %c0_i32_0 = arith.constant 0 : i32
    return %arg0, %c0_i32 : i32, i32
  }
}

</mosaic_0001>

<llo_original>
// kernel: tpu_custom_call.1
$region0: #{tpu_custom_call.1}
  #allocation0 [shape = 'u32[]', space=smem, size = 0x4, offset = 0x4, fixed_abs, tag = 'smem constant byte address 0x4 - core index']
  #allocation1 [shape = 'u32[144,128]{1,0:T(1,128)}', space=vmem, size = 0x12000, scoped, tag = 'internal scratch']
  %s0 = inlined_call_operand.hbm [shape: f32[16,128], index: 0, kind: input, shape index: {}]
  %s1 = inlined_call_operand.hbm [shape: f32[16,128], index: 1, kind: output, shape index: {}]
  %s2 = sld [smem:[#allocation0]]
  $region18: #{tpu_custom_call.1} parent=0
    _
  %s4 = ssub.s32 1, %s2
  %s5 = scalar_select 0, %s4, %s2
  $region1: #{tpu_custom_call.1} parent=0
    #allocation2 [shape = 'u8[8192]{0}', space=vmem, size = 0x2000, scoped, tag = 'input window, operand 0, single buffered']
    #allocation3 [shape = 's32[1]{0}', space=sflag, size = 0x4, scoped, tag = 'scoped memory for tpu_custom_call.1']
    #allocation4 [shape = 's32[1]{0}', space=sflag, size = 0x4, scoped, tag = 'scoped memory for tpu_custom_call.1']
    #allocation5 [shape = 'u8[8192]{0}', space=vmem, size = 0x2000, scoped, tag = 'output window, operand 0, single buffered']
    %6 = vsyncpa [#allocation3], 0
    %7 = vsyncpa [#allocation4], 0
    // Predicated region
    $region2: #{tpu_custom_call.1} parent=1 // pred_check
      _
    $region3: #{tpu_custom_call.1} parent=1 // pred_check_branch
      %9 = sbr.rel (0) target = $region5
    $region4: #{tpu_custom_call.1} parent=1 // pred_region
      %s11 = ssub.s32 256, 256
      %12 = vsyncadd [#allocation3], %s11
      %s13 = sshll.u32 [#allocation2], 4
      %s14 = int_to_ptr.vmem [resolvable:$true] %s13
      %19 = dma.hbm_to_vmem [thread:$0]  %s0, 256, %s14, [#allocation3], 128, 128, 8
    $region5: #{tpu_custom_call.1} parent=1 // pred_fallthru
      _
    // Predicated region
    $region6: #{tpu_custom_call.1} parent=1 // pred_check
      _
    $region7: #{tpu_custom_call.1} parent=1 // pred_check_branch
      %21 = sbr.rel (0) target = $region9
    $region8: #{tpu_custom_call.1} parent=1 // pred_region
      %22 = dma.done [#allocation3], 256
    $region9: #{tpu_custom_call.1} parent=1 // pred_fallthru
      _
    %v23 = vld [vmem:[#allocation2] sm:$0xff]
    %v24 = vld [vmem:[#allocation2 + $0x8] sm:$0xff]
    %25 = vst [vmem:[#allocation5] sm:$0xff] %v23
    %26 = vst [vmem:[#allocation5 + $0x8] sm:$0xff] %v24
    // Predicated region
    $region10: #{tpu_custom_call.1} parent=1 // pred_check
      _
    $region11: #{tpu_custom_call.1} parent=1 // pred_check_branch
      %28 = sbr.rel (0) target = $region13
    $region12: #{tpu_custom_call.1} parent=1 // pred_region
      %s30 = ssub.s32 256, 256
      %31 = vsyncadd [#allocation4], %s30
      %s32 = sshll.u32 [#allocation5], 4
      %s33 = int_to_ptr.vmem [resolvable:$true] %s32
      %38 = dma.vmem_to_hbm [thread:$0]  %s33, 256, %s1, [#allocation4], 128, 128, 8
    $region13: #{tpu_custom_call.1} parent=1 // pred_fallthru
      _
    // Predicated region
    $region14: #{tpu_custom_call.1} parent=1 // pred_check
      _
    $region15: #{tpu_custom_call.1} parent=1 // pred_check_branch
      %40 = sbr.rel (0) target = $region17
    $region16: #{tpu_custom_call.1} parent=1 // pred_region
      %41 = dma.done [#allocation4], 256
    $region17: #{tpu_custom_call.1} parent=1 // pred_fallthru
      _
    %42 = vsyncpa [#allocation3], 1
    %43 = vsyncpa [#allocation4], 1

</llo_original>
